<compile_context>
chip_gen: v7x
topology: tpu7x:2x2x1
jax: 0.10.0
libtpu: 0.0.40
codegen_flags: <defaults>
</compile_context>

<pallas_src>
import math
from functools import partial

import numpy as np
import jax
import jax.numpy as jnp
from jax.experimental import pallas as pl
from jax.experimental.pallas import tpu as pltpu


# ----------------------------------------------------------------------------
# Gabor filter weight generation (straight port of the numpy reference code)
# ----------------------------------------------------------------------------
def gen_gabor(sz, theta, gamma, sigma, sf, phi=0.0, contrast=2.0):
    location = (sz[0] // 2, sz[1] // 2)
    x, y = np.meshgrid(np.arange(sz[0]) - location[0],
                       np.arange(sz[1]) - location[1])
    x_theta = x * np.cos(theta) + y * np.sin(theta)
    y_theta = -x * np.sin(theta) + y * np.cos(theta)
    envelope = 0.5 * contrast * np.exp(
        -(x_theta ** 2 + (y_theta * gamma) ** 2) / (2 * sigma ** 2))
    gabor = envelope * np.cos(2 * math.pi * x_theta * sf + phi)
    return gabor


def generate_gabor_filter_weights(sz, l_theta, l_sfs, l_phase, gamma=1,
                                  contrast=1):
    bank = []
    for theta in l_theta:
        for sf in l_sfs:
            for phase in l_phase:
                g = gen_gabor(sz=(sz, sz), theta=theta, gamma=gamma,
                              sigma=sz / 4, sf=sf / sz, phi=phase,
                              contrast=contrast)
                bank.append(g)
    bank = np.array(bank, dtype=np.float32)        # (O, sz, sz)
    return np.expand_dims(bank, 1)                 # (O, 1, sz, sz)


# ----------------------------------------------------------------------------
# Tiling helpers
# ----------------------------------------------------------------------------
def _pick_block_rows(H, W, N, lane_cap):
    """Largest divisor BH of H s.t. BH*W is 128-aligned (unmasked stores) and
    under the lane cap (bounds per-step VMEM); prefer >=2 total grid steps."""
    cands = []
    for bh in range(1, H + 1):
        if H % bh:
            continue
        bhw = bh * W
        legal = (bhw % 128 == 0) or (bh == H)     # (8,128)/full-dim rule
        if not legal:
            continue
        fits = bhw <= lane_cap
        aligned = bhw % 128 == 0
        multi = N * (H // bh) >= 2                # feed both v7x TensorCores
        cands.append(((fits, aligned, multi, bh), bh))
    return max(cands)[1]


def _pick_chunk(BHW):
    """Lane-chunk width: <=512 so the (O, CW) f32 accumulator fits in vregs."""
    for cw in (512, 256, 128):
        if BHW % cw == 0:
            return cw
    return BHW


# ----------------------------------------------------------------------------
# Pallas kernel: per (image, row-block) tile, SZ accumulating MXU dots per
# lane chunk, bias epilogue, lane-dense NCHW-flat output stores.  All slice
# offsets are static; there is no scratch and no in-kernel im2col.
# ----------------------------------------------------------------------------
def _gabor_bank_kernel(xs_ref, w_ref, b_ref, o_ref, *, SZ, W, BHW, CW):
    # xs_ref: (1, 1, SZ, (BH+SZ-1)*W)  dx-planes of the channel-summed, padded
    #                                   input; block rows (+halo) flat in lanes
    # w_ref:  (SZ, O, SZ)               w_ref[dy, o, dx] = gabor[o, dy, dx]
    # b_ref:  (O, 1) float32            bias
    # o_ref:  (1, O, BHW)               NCHW-flat output tile (lane-dense)
    ws = [w_ref[dy] for dy in range(SZ)]           # SZ small (O, SZ) tiles
    bias = b_ref[...]                              # (O, 1) f32
    for c0 in range(0, BHW, CW):                   # static lane-chunk loop
        acc = None                                 # f32 acc stays in vregs
        for dy in range(SZ):
            a = dy * W + c0
            rhs = xs_ref[0, 0, :, a:a + CW]        # (SZ, CW), static window
            d = jnp.dot(ws[dy], rhs, preferred_element_type=jnp.float32)
            acc = d if acc is None else acc + d
        acc = acc + bias                           # epilogue bias add
        o_ref[0, :, c0:c0 + CW] = acc.astype(o_ref.dtype)


# ----------------------------------------------------------------------------
# GaborFilterBank module equivalent
# ----------------------------------------------------------------------------
class GaborFilterBankPallas:
    def __init__(self, in_channels, l_filter_size, l_theta, l_sfs, l_phase,
                 contrast=1.0, stride=1, compute_dtype=jnp.float32,
                 out_dtype=jnp.float32, max_block_lanes=16384, key=None):
        assert stride == 1, "only stride=1 implemented"
        # TODO(synk): padding_mode other than 'zeros' is not implemented.
        self.l_filter_size = [int(i) for i in l_filter_size]
        assert all(s % 2 == 1 for s in self.l_filter_size), \
            "odd filter sizes required (matches the module's 'same' conv)"
        self.in_channels = in_channels
        self.compute_dtype = compute_dtype
        self.out_dtype = out_dtype
        self.max_block_lanes = int(max_block_lanes)
        self.SZ = max(self.l_filter_size)           # fused window size
        self.PAD = (self.SZ - 1) // 2

        if key is None:
            key = jax.random.PRNGKey(0)

        self.per_conv = []   # (sz, bank (O_sz,sz,sz), bias (O_sz,)) for ref
        banks, biases = [], []
        for sz in self.l_filter_size:
            bank = generate_gabor_filter_weights(
                sz, l_theta, l_sfs, l_phase, contrast=contrast)[:, 0]
            O_sz = bank.shape[0]
            # Deterministic bias init mimicking nn.Conv2d default
            # U(-1/sqrt(fan_in), 1/sqrt(fan_in)), fan_in = C*sz*sz.
            fan_in = in_channels * sz * sz
            bound = 1.0 / math.sqrt(fan_in)
            key, sub = jax.random.split(key)
            bias = np.asarray(
                jax.random.uniform(sub, (O_sz,), jnp.float32, -bound, bound))
            self.per_conv.append((sz, bank, bias))
            # Zero-embed the sz x sz bank centered in the SZ x SZ fused window
            # (exact for stride=1 'same' padding, odd sizes) -> both filter
            # sizes run in one pallas_call with one weight tensor.
            off = (self.SZ - sz) // 2
            emb = np.zeros((O_sz, self.SZ, self.SZ), np.float32)
            emb[:, off:off + sz, off:off + sz] = bank
            banks.append(emb)
            biases.append(bias)
        w_full = np.concatenate(banks, axis=0)       # (O, SZ, SZ)
        self.out_dim = w_full.shape[0]
        # (SZ, O, SZ): leading dy so the kernel grabs one (O, SZ) tile per dy.
        self.w_dy = jnp.asarray(
            np.ascontiguousarray(np.transpose(w_full, (1, 0, 2))))
        self.bias = jnp.asarray(
            np.concatenate(biases, axis=0)[:, None].astype(np.float32))
        self._forward = jax.jit(self._forward_impl)

    def _forward_impl(self, x):
        N, C, H, W = x.shape
        SZ, PAD, O = self.SZ, self.PAD, self.out_dim
        cdt = self.compute_dtype

        BH = _pick_block_rows(H, W, N, self.max_block_lanes)
        HB = H // BH
        BHW = BH * W
        CW = _pick_chunk(BHW)
        Lh = (BH + SZ - 1) * W                      # block rows + halo, flat

        # --- staging: one fused XLA pass over the small channel-summed input.
        # Channel collapse is exact (gabor weights are broadcast over C).
        x_sum = jnp.sum(x, axis=1)                                  # (N,H,W)
        xpad = jnp.pad(x_sum, ((0, 0), (PAD, PAD), (PAD, PAD)))     # (N,Hp,Wp)
        xs = jnp.stack([xpad[:, :, dx:dx + W] for dx in range(SZ)],
                       axis=1)                                      # (N,SZ,Hp,W)
        tiles = jnp.stack(
            [xs[:, :, hb * BH: hb * BH + BH + SZ - 1, :] for hb in range(HB)],
            axis=1)                                  # (N,HB,SZ,BH+SZ-1,W)
        xs_tiles = tiles.reshape(N, HB, SZ, Lh).astype(cdt)

        w_dy = self.w_dy.astype(cdt)                 # (SZ, O, SZ)
        bias = self.bias                             # (O, 1) f32

        comp_sz = np.dtype(cdt).itemsize
        out_sz = np.dtype(self.out_dtype).itemsize
        need = (2 * (SZ * Lh * comp_sz + O * BHW * out_sz)     # dbl-buffered io
                + 2 * O * CW * 4                               # acc temporaries
                + SZ * O * SZ * comp_sz + O * 4)
        vmem_limit = int(min(64 * 2 ** 20, max(32 * 2 ** 20, 2 * need)))

        kernel = partial(_gabor_bank_kernel, SZ=SZ, W=W, BHW=BHW, CW=CW)
        out_flat = pl.pallas_call(
            kernel,
            out_shape=jax.ShapeDtypeStruct((N, O, H * W), self.out_dtype),
            grid=(N, HB),
            in_specs=[
                pl.BlockSpec((1, 1, SZ, Lh), lambda n, hb: (n, hb, 0, 0)),
                pl.BlockSpec((SZ, O, SZ), lambda n, hb: (0, 0, 0)),
                pl.BlockSpec((O, 1), lambda n, hb: (0, 0)),
            ],
            out_specs=pl.BlockSpec((1, O, BHW), lambda n, hb: (n, 0, hb)),
            compiler_params=pltpu.CompilerParams(
                dimension_semantics=("parallel", "parallel"),
                vmem_limit_bytes=vmem_limit),
        )(xs_tiles, w_dy, bias)
        # Kernel already emits channel-major (NCHW-flat) data: free reshape.
        return out_flat.reshape(N, O, H, W)

    def __call__(self, x_nchw):
        return self._forward(jnp.asarray(x_nchw, jnp.float32))


# ----------------------------------------------------------------------------
# Float64 NumPy reference, faithful to the PyTorch module:
# per-size Conv2d with the (O,1,sz,sz) gabor bank broadcast over in_channels,
# stride=1, padding=(sz-1)//2, bias, then concat along channels.
# ----------------------------------------------------------------------------
def reference_forward_np(x_np, per_conv):
    x64 = np.asarray(x_np, np.float64)
    N, C, H, W = x64.shape
    outs = []
    for sz, g, b in per_conv:
        pad = (sz - 1) // 2
        xp = np.pad(x64, ((0, 0), (0, 0), (pad, pad), (pad, pad)))
        O = g.shape[0]
        y = np.zeros((N, O, H, W), np.float64)
        g64 = g.astype(np.float64)
        for u in range(sz):
            for v in range(sz):
                win = xp[:, :, u:u + H, v:v + W].sum(axis=1)   # (N,H,W)
                y += g64[None, :, u, v, None, None] * win[:, None, :, :]
        y += b.astype(np.float64)[None, :, None, None]
        outs.append(y)
    return np.concatenate(outs, axis=1)


if __name__ == "__main__":
    key = jax.random.PRNGKey(0)
    k_x, k_params = jax.random.split(key)

    N, C, H, W = 2, 4, 16, 16
    x = jax.random.normal(k_x, (N, C, H, W), jnp.float32)

    l_filter_size = [3, 5]
    l_theta = [0.0, math.pi / 4, math.pi / 2, 3 * math.pi / 4]
    l_sfs = [1.0, 2.0]
    l_phase = [0.0, math.pi / 2]

    bank = GaborFilterBankPallas(
        in_channels=C, l_filter_size=l_filter_size, l_theta=l_theta,
        l_sfs=l_sfs, l_phase=l_phase, contrast=1.0,
        compute_dtype=jnp.float32, out_dtype=jnp.float32, key=k_params)

    out = jax.block_until_ready(bank(x))
    expected_channels = (len(l_filter_size) * len(l_theta) * len(l_sfs)
                         * len(l_phase))
    assert out.shape == (N, expected_channels, H, W), out.shape

    ref = reference_forward_np(np.asarray(x), bank.per_conv)
    np.testing.assert_allclose(np.asarray(out), ref, rtol=1e-4, atol=1e-3)

    # bf16 fast path: bf16 MXU operands + bf16 output (halves the dominant
    # HBM write), f32 accumulation, no in-kernel bf16<->f32 round trips.
    bank_bf16 = GaborFilterBankPallas(
        in_channels=C, l_filter_size=l_filter_size, l_theta=l_theta,
        l_sfs=l_sfs, l_phase=l_phase, contrast=1.0,
        compute_dtype=jnp.bfloat16, out_dtype=jnp.bfloat16, key=k_params)
    out_bf16 = jax.block_until_ready(bank_bf16(x))
    np.testing.assert_allclose(
        np.asarray(out_bf16.astype(jnp.float32)), ref, rtol=5e-2, atol=2e-1)

    print("KERNEL_OK")
</pallas_src>

<mosaic_0001>
module attributes {stable_mosaic.version = 11 : i64} {
  func.func @_gabor_bank_kernel(%arg0: i32, %arg1: i32, %arg2: memref<1x1x5x320xf32, #tpu.memory_space<vmem>>, %arg3: memref<5x32x5xf32, #tpu.memory_space<vmem>>, %arg4: memref<32x1xf32, #tpu.memory_space<vmem>>, %arg5: memref<1x32x256xf32, #tpu.memory_space<vmem>>) attributes {dimension_semantics = [#tpu.dimension_semantics<parallel>, #tpu.dimension_semantics<parallel>], iteration_bounds = array<i64: 2, 1>, scalar_prefetch = 0 : i64, scratch_operands = 0 : i64, tpu.core_type = #tpu.core_type<tc>, window_params = [{transform_indices = @transform_0, window_bounds = array<i64: 1, 1, 5, 320>}, {pipeline_mode = #tpu.pipeline_mode<synchronous>, transform_indices = @transform_1, window_bounds = array<i64: 5, 32, 5>}, {pipeline_mode = #tpu.pipeline_mode<synchronous>, transform_indices = @transform_2, window_bounds = array<i64: 32, 1>}, {transform_indices = @transform_3, window_bounds = array<i64: 1, 32, 256>}]} {
    %c0 = arith.constant 0 : index
    %c0_0 = arith.constant 0 : index
    %c0_1 = arith.constant 0 : index
    %0 = vector.load %arg3[%c0, %c0_0, %c0_1] : memref<5x32x5xf32, #tpu.memory_space<vmem>>, vector<1x32x5xf32>
    %1 = vector.shape_cast %0 : vector<1x32x5xf32> to vector<32x5xf32>
    %c1 = arith.constant 1 : index
    %c0_2 = arith.constant 0 : index
    %c0_3 = arith.constant 0 : index
    %2 = vector.load %arg3[%c1, %c0_2, %c0_3] : memref<5x32x5xf32, #tpu.memory_space<vmem>>, vector<1x32x5xf32>
    %3 = vector.shape_cast %2 : vector<1x32x5xf32> to vector<32x5xf32>
    %c2 = arith.constant 2 : index
    %c0_4 = arith.constant 0 : index
    %c0_5 = arith.constant 0 : index
    %4 = vector.load %arg3[%c2, %c0_4, %c0_5] : memref<5x32x5xf32, #tpu.memory_space<vmem>>, vector<1x32x5xf32>
    %5 = vector.shape_cast %4 : vector<1x32x5xf32> to vector<32x5xf32>
    %c3 = arith.constant 3 : index
    %c0_6 = arith.constant 0 : index
    %c0_7 = arith.constant 0 : index
    %6 = vector.load %arg3[%c3, %c0_6, %c0_7] : memref<5x32x5xf32, #tpu.memory_space<vmem>>, vector<1x32x5xf32>
    %7 = vector.shape_cast %6 : vector<1x32x5xf32> to vector<32x5xf32>
    %c4 = arith.constant 4 : index
    %c0_8 = arith.constant 0 : index
    %c0_9 = arith.constant 0 : index
    %8 = vector.load %arg3[%c4, %c0_8, %c0_9] : memref<5x32x5xf32, #tpu.memory_space<vmem>>, vector<1x32x5xf32>
    %9 = vector.shape_cast %8 : vector<1x32x5xf32> to vector<32x5xf32>
    %c0_10 = arith.constant 0 : index
    %c0_11 = arith.constant 0 : index
    %10 = vector.load %arg4[%c0_10, %c0_11] : memref<32x1xf32, #tpu.memory_space<vmem>>, vector<32x1xf32>
    %c0_12 = arith.constant 0 : index
    %c0_13 = arith.constant 0 : index
    %c0_14 = arith.constant 0 : index
    %c0_15 = arith.constant 0 : index
    %11 = vector.load %arg2[%c0_12, %c0_13, %c0_14, %c0_15] : memref<1x1x5x320xf32, #tpu.memory_space<vmem>>, vector<1x1x5x256xf32>
    %12 = vector.shape_cast %11 : vector<1x1x5x256xf32> to vector<5x256xf32>
    %cst = arith.constant dense<0.000000e+00> : vector<32x256xf32>
    %13 = tpu.matmul %1, %12, %cst {dimension_numbers = #tpu.dot_dimension_numbers<[1], [0], [0], [1], [0, 0, 1, 1], [], []>} : vector<32x5xf32>, vector<5x256xf32>, vector<32x256xf32> -> vector<32x256xf32>
    %c0_16 = arith.constant 0 : index
    %c0_17 = arith.constant 0 : index
    %c0_18 = arith.constant 0 : index
    %c16 = arith.constant 16 : index
    %14 = vector.load %arg2[%c0_16, %c0_17, %c0_18, %c16] : memref<1x1x5x320xf32, #tpu.memory_space<vmem>>, vector<1x1x5x256xf32>
    %15 = vector.shape_cast %14 : vector<1x1x5x256xf32> to vector<5x256xf32>
    %cst_19 = arith.constant dense<0.000000e+00> : vector<32x256xf32>
    %16 = tpu.matmul %3, %15, %cst_19 {dimension_numbers = #tpu.dot_dimension_numbers<[1], [0], [0], [1], [0, 0, 1, 1], [], []>} : vector<32x5xf32>, vector<5x256xf32>, vector<32x256xf32> -> vector<32x256xf32>
    %17 = arith.addf %13, %16 : vector<32x256xf32>
    %c0_20 = arith.constant 0 : index
    %c0_21 = arith.constant 0 : index
    %c0_22 = arith.constant 0 : index
    %c32 = arith.constant 32 : index
    %18 = vector.load %arg2[%c0_20, %c0_21, %c0_22, %c32] : memref<1x1x5x320xf32, #tpu.memory_space<vmem>>, vector<1x1x5x256xf32>
    %19 = vector.shape_cast %18 : vector<1x1x5x256xf32> to vector<5x256xf32>
    %cst_23 = arith.constant dense<0.000000e+00> : vector<32x256xf32>
    %20 = tpu.matmul %5, %19, %cst_23 {dimension_numbers = #tpu.dot_dimension_numbers<[1], [0], [0], [1], [0, 0, 1, 1], [], []>} : vector<32x5xf32>, vector<5x256xf32>, vector<32x256xf32> -> vector<32x256xf32>
    %21 = arith.addf %17, %20 : vector<32x256xf32>
    %c0_24 = arith.constant 0 : index
    %c0_25 = arith.constant 0 : index
    %c0_26 = arith.constant 0 : index
    %c48 = arith.constant 48 : index
    %22 = vector.load %arg2[%c0_24, %c0_25, %c0_26, %c48] : memref<1x1x5x320xf32, #tpu.memory_space<vmem>>, vector<1x1x5x256xf32>
    %23 = vector.shape_cast %22 : vector<1x1x5x256xf32> to vector<5x256xf32>
    %cst_27 = arith.constant dense<0.000000e+00> : vector<32x256xf32>
    %24 = tpu.matmul %7, %23, %cst_27 {dimension_numbers = #tpu.dot_dimension_numbers<[1], [0], [0], [1], [0, 0, 1, 1], [], []>} : vector<32x5xf32>, vector<5x256xf32>, vector<32x256xf32> -> vector<32x256xf32>
    %25 = arith.addf %21, %24 : vector<32x256xf32>
    %c0_28 = arith.constant 0 : index
    %c0_29 = arith.constant 0 : index
    %c0_30 = arith.constant 0 : index
    %c64 = arith.constant 64 : index
    %26 = vector.load %arg2[%c0_28, %c0_29, %c0_30, %c64] : memref<1x1x5x320xf32, #tpu.memory_space<vmem>>, vector<1x1x5x256xf32>
    %27 = vector.shape_cast %26 : vector<1x1x5x256xf32> to vector<5x256xf32>
    %cst_31 = arith.constant dense<0.000000e+00> : vector<32x256xf32>
    %28 = tpu.matmul %9, %27, %cst_31 {dimension_numbers = #tpu.dot_dimension_numbers<[1], [0], [0], [1], [0, 0, 1, 1], [], []>} : vector<32x5xf32>, vector<5x256xf32>, vector<32x256xf32> -> vector<32x256xf32>
    %29 = arith.addf %25, %28 : vector<32x256xf32>
    %30 = vector.broadcast %10 : vector<32x1xf32> to vector<32x256xf32>
    %31 = arith.addf %29, %30 : vector<32x256xf32>
    %c0_32 = arith.constant 0 : index
    %c0_33 = arith.constant 0 : index
    %c0_34 = arith.constant 0 : index
    %32 = vector.load %arg5[%c0_32, %c0_33, %c0_34] : memref<1x32x256xf32, #tpu.memory_space<vmem>>, vector<1x32x256xf32>
    %33 = vector.shape_cast %32 : vector<1x32x256xf32> to vector<32x256xf32>
    %34 = vector.shape_cast %31 : vector<32x256xf32> to vector<1x32x256xf32>
    tpu.vector_store %arg5[%c0_32, %c0_33, %c0_34], %34 {strides = array<i32>} : memref<1x32x256xf32, #tpu.memory_space<vmem>>, vector<1x32x256xf32>,
    return
  }
  func.func @transform_0(%arg0: i32, %arg1: i32) -> (i32, i32, i32, i32) {
    %c0_i32 = arith.constant 0 : i32
    %c0_i32_0 = arith.constant 0 : i32
    %c0_i32_1 = arith.constant 0 : i32
    return %arg0, %arg1, %c0_i32, %c0_i32_0 : i32, i32, i32, i32
  }
  func.func @transform_1(%arg0: i32, %arg1: i32) -> (i32, i32, i32) {
    %c0_i32 = arith.constant 0 : i32
    %c0_i32_0 = arith.constant 0 : i32
    %c0_i32_1 = arith.constant 0 : i32
    %c0_i32_2 = arith.constant 0 : i32
    return %c0_i32, %c0_i32_0, %c0_i32_1 : i32, i32, i32
  }
  func.func @transform_2(%arg0: i32, %arg1: i32) -> (i32, i32) {
    %c0_i32 = arith.constant 0 : i32
    %c0_i32_0 = arith.constant 0 : i32
    %c0_i32_1 = arith.constant 0 : i32
    return %c0_i32, %c0_i32_0 : i32, i32
  }
  func.func @transform_3(%arg0: i32, %arg1: i32) -> (i32, i32, i32) {
    %c0_i32 = arith.constant 0 : i32
    %c0_i32_0 = arith.constant 0 : i32
    return %arg0, %c0_i32, %arg1 : i32, i32, i32
  }
}

</mosaic_0001>

<llo_original>
// kernel: _forward_impl.1
$region0: #{_forward_impl.1}
  #allocation0 [shape = 'u32[]', space=smem, size = 0x4, offset = 0x4, fixed_abs, tag = 'smem constant byte address 0x4 - core index']
  #allocation1 [shape = 'u32[144,128]{1,0:T(1,128)}', space=vmem, size = 0x12000, scoped, tag = 'internal scratch']
  %s0 = inlined_call_operand.vmem [shape: f32[2,1,5,320], index: 0, kind: input, shape index: {}]
  %s1 = inlined_call_operand.vmem [shape: f32[5,32,5], index: 1, kind: input, shape index: {}]
  %s2 = inlined_call_operand.vmem [shape: f32[32,1], index: 2, kind: input, shape index: {}]
  %s3 = inlined_call_operand.vmem [shape: f32[2,32,256], index: 3, kind: output, shape index: {}]
  %s4 = sld [smem:[#allocation0]]
  $region45: #{_forward_impl.1} parent=0
    _
  %s6 = ssub.s32 1, %s4
  %s7 = scalar_select 0, %s6, %s4
  loop: start=0, step=1, limit=4
  $region2: #{_forward_impl.1} parent=0 // loop_pre_header
    _
  $region3: #{_forward_impl.1} parent=0 // loop_header
    %s9 = sphi 0, %s13
    %p10 = scmp.ge.s32.totalorder %s9, 4
    %s16 = sphi 0, %s28
    %s17 = sphi 0, %s24
    %s18 = sphi 0, %s16
    %s19 = sphi 0, %s17
    %s20 = sphi 0, %s18
    %s21 = sphi 0, %s19
    %s33 = sphi 0, %s35
    %s36 = sphi 0, %s33
    %s37 = sphi 0, %s36
    %s53 = sphi 0, %s37
    %s57 = sphi 0, %s57
    %s59 = sphi 0, %s57
    %s60 = sphi 0, %s59
    %s74 = sphi 0, %s60
    %s78 = sphi 0, %s78
    %s80 = sphi 0, %s78
    %s81 = sphi 0, %s80
    %s95 = sphi 0, %s81
    %s103 = sphi 0, %s105
    %s106 = sphi 0, %s103
    %s107 = sphi 0, %s106
    %s123 = sphi 0, %s107
  $region4: #{_forward_impl.1} parent=0 // loop_header_branch
    %12 = sbr.rel (%p10) target = $region8
  $region5: #{_forward_impl.1} parent=0 // loop_body
    %s14 = ssub.s32 %s9, 1
    %s15 = ssub.s32 %s9, 2
    %s22 = sadd.s32 1, %s17
    %p23 = scmp.ge.s32.totalorder %s22, 1
    %s24 = scalar_select %p23, 0, %s22
    %s25 = sadd.s32 1, %s16
    %s26 = scalar_select %p23, %s25, %s16
    %p27 = scmp.ge.s32.totalorder %s26, 2
    %s28 = scalar_select %p27, 0, %s26
    %s29 = ssub.s32 %s16, %s28
    %s30 = ssub.s32 %s17, %s24
    %s31 = sor.u32 %s29, %s30
    %p32 = scmp.eq.s32.totalorder %s31, 0
    %s34 = sadd.s32 %s33, 1
    %s35 = scalar_select %p32, %s33, %s34
    %p38 = pneg %p32
    %p39 = scmp.eq.s32.totalorder %s9, 1
    %p40 = por %p38, %p39
    %p41 = scmp.ne.s32.totalorder %s33, %s36
    %p42 = scmp.eq.s32.totalorder %s9, 0
    %p43 = por %p41, %p42
    %p44 = scmp.ne.s32.totalorder %s33, %s36
    %p45 = scmp.eq.s32.totalorder %s14, 1
    %p46 = por %p44, %p45
    %p47 = scmp.ne.s32.totalorder %s36, %s37
    %p48 = scmp.eq.s32.totalorder %s14, 0
    %p49 = por %p47, %p48
    %p50 = scmp.ne.s32.totalorder %s36, %s37
    %p51 = scmp.eq.s32.totalorder %s15, 1
    %p52 = por %p50, %p51
    %p54 = scmp.ne.s32.totalorder %s37, %s53
    %p55 = scmp.eq.s32.totalorder %s15, 0
    %p56 = por %p54, %p55
    %s58 = sadd.s32 %s57, 1
    %p61 = scmp.eq.s32.totalorder %s9, 1
    %p62 = scmp.ne.s32.totalorder %s57, %s59
    %p63 = scmp.eq.s32.totalorder %s9, 0
    %p64 = por %p62, %p63
    %p65 = scmp.ne.s32.totalorder %s57, %s59
    %p66 = scmp.eq.s32.totalorder %s14, 1
    %p67 = por %p65, %p66
    %p68 = scmp.ne.s32.totalorder %s59, %s60
    %p69 = scmp.eq.s32.totalorder %s14, 0
    %p70 = por %p68, %p69
    %p71 = scmp.ne.s32.totalorder %s59, %s60
    %p72 = scmp.eq.s32.totalorder %s15, 1
    %p73 = por %p71, %p72
    %p75 = scmp.ne.s32.totalorder %s60, %s74
    %p76 = scmp.eq.s32.totalorder %s15, 0
    %p77 = por %p75, %p76
    %s79 = sadd.s32 %s78, 1
    %p82 = scmp.eq.s32.totalorder %s9, 1
    %p83 = scmp.ne.s32.totalorder %s78, %s80
    %p84 = scmp.eq.s32.totalorder %s9, 0
    %p85 = por %p83, %p84
    %p86 = scmp.ne.s32.totalorder %s78, %s80
    %p87 = scmp.eq.s32.totalorder %s14, 1
    %p88 = por %p86, %p87
    %p89 = scmp.ne.s32.totalorder %s80, %s81
    %p90 = scmp.eq.s32.totalorder %s14, 0
    %p91 = por %p89, %p90
    %p92 = scmp.ne.s32.totalorder %s80, %s81
    %p93 = scmp.eq.s32.totalorder %s15, 1
    %p94 = por %p92, %p93
    %p96 = scmp.ne.s32.totalorder %s81, %s95
    %p97 = scmp.eq.s32.totalorder %s15, 0
    %p98 = por %p96, %p97
    %s99 = ssub.s32 %s16, %s28
    %s100 = ssub.s32 %s17, %s24
    %s101 = sor.u32 %s99, %s100
    %p102 = scmp.eq.s32.totalorder %s101, 0
    %s104 = sadd.s32 %s103, 1
    %s105 = scalar_select %p102, %s103, %s104
    %p108 = pneg %p102
    %p109 = scmp.eq.s32.totalorder %s9, 1
    %p110 = por %p108, %p109
    %p111 = scmp.ne.s32.totalorder %s103, %s106
    %p112 = scmp.eq.s32.totalorder %s9, 0
    %p113 = por %p111, %p112
    %p114 = scmp.ne.s32.totalorder %s103, %s106
    %p115 = scmp.eq.s32.totalorder %s14, 1
    %p116 = por %p114, %p115
    %p117 = scmp.ne.s32.totalorder %s106, %s107
    %p118 = scmp.eq.s32.totalorder %s14, 0
    %p119 = por %p117, %p118
    %p120 = scmp.ne.s32.totalorder %s106, %s107
    %p121 = scmp.eq.s32.totalorder %s15, 1
    %p122 = por %p120, %p121
    %p124 = scmp.ne.s32.totalorder %s107, %s123
    %p125 = scmp.eq.s32.totalorder %s15, 0
    %p126 = por %p124, %p125
    %p127 = scmp.le.s32.totalorder 1, %s9
    %p128 = scmp.lt.s32.totalorder %s9, 3
    %p129 = pnand %p127, %p128
    %p130 = pneg %p129
    // Predicated region
    $region9: #{_forward_impl.1} parent=5 // pred_check
      _
    $region10: #{_forward_impl.1} parent=5 // pred_check_branch
      %132 = sbr.rel (%p129) target = $region12
    $region11: #{_forward_impl.1} parent=5 // pred_region
      %s133 = ssub.s32 %s9, 1
      // Predicated region
      $region13: #{_forward_impl.1} parent=11 // pred_check
        %p134 = pneg %p70
      $region14: #{_forward_impl.1} parent=11 // pred_check_branch
        %136 = sbr.rel (%p134) target = $region16
      $region15: #{_forward_impl.1} parent=11 // pred_region
        _
      $region16: #{_forward_impl.1} parent=11 // pred_fallthru
        _
      // Predicated region
      $region17: #{_forward_impl.1} parent=11 // pred_check
        %p137 = pneg %p91
      $region18: #{_forward_impl.1} parent=11 // pred_check_branch
        %139 = sbr.rel (%p137) target = $region20
      $region19: #{_forward_impl.1} parent=11 // pred_region
        _
      $region20: #{_forward_impl.1} parent=11 // pred_fallthru
        _
    $region12: #{_forward_impl.1} parent=5 // pred_fallthru
      _
    %p140 = scmp.lt.s32.totalorder %s9, 2
    // Predicated region
    $region21: #{_forward_impl.1} parent=5 // pred_check
      %p141 = pneg %p140
    $region22: #{_forward_impl.1} parent=5 // pred_check_branch
      %143 = sbr.rel (%p141) target = $region24
    $region23: #{_forward_impl.1} parent=5 // pred_region
      // Predicated region
      $region25: #{_forward_impl.1} parent=23 // pred_check
        %p144 = pneg %p43
      $region26: #{_forward_impl.1} parent=23 // pred_check_branch
        %146 = sbr.rel (%p144) target = $region28
      $region27: #{_forward_impl.1} parent=23 // pred_region
        %p147 = scmp.lt.s32.totalorder %s16, 1
        %s148 = scalar_select %p147, %s16, 1
        %p149 = scmp.lt.s32.totalorder %s17, 0
        %s150 = scalar_select %p149, %s17, 0
        %s151 = smul.addr %s150, 3
        %s152 = smul.addr %s148, 3
        %s153 = sadd.s32 %s151, %s152
        %s154 = smul.addr %s153, 8
        %s155 = scalar_lea.vmem %s0, %s154
      $region28: #{_forward_impl.1} parent=23 // pred_fallthru
        _
    $region24: #{_forward_impl.1} parent=5 // pred_fallthru
      _
    %p156 = scmp.le.s32.totalorder 1, %s9
    %p157 = scmp.lt.s32.totalorder %s9, 3
    %p158 = pnand %p156, %p157
    %p159 = pneg %p158
    // Predicated region
    $region29: #{_forward_impl.1} parent=5 // pred_check
      _
    $region30: #{_forward_impl.1} parent=5 // pred_check_branch
      %161 = sbr.rel (%p158) target = $region32
    $region31: #{_forward_impl.1} parent=5 // pred_region
      %s162 = ssub.s32 %s9, 1
      %p163 = scmp.lt.s32.totalorder %s18, 1
      %s164 = scalar_select %p163, %s18, 1
      %p165 = scmp.lt.s32.totalorder %s19, 0
      %s166 = scalar_select %p165, %s19, 0
      %s167 = smul.addr %s166, 3
      %s168 = smul.addr %s164, 3
      %s169 = sadd.s32 %s167, %s168
      %s170 = smul.addr %s169, 8
      %s171 = scalar_lea.vmem %s0, %s170
      %p172 = pneg %p49
      %p173 = pneg %p46
      %p174 = pneg %p70
      %p175 = pneg %p67
      %p176 = pneg %p91
      %p177 = pneg %p88
      %p178 = pneg %p119
      %p179 = pneg %p116
      %s180 = smul.u32 2, %s19
      %p181 = scmp.lt.s32.totalorder %s18, 1
      %s182 = scalar_select %p181, %s18, 1
      %p183 = scmp.lt.s32.totalorder %s180, 1
      %s184 = scalar_select %p183, %s180, 1
      %s185 = smul.addr %s182, 8
      %s186 = sadd.s32 %s184, %s185
      %s187 = smul.addr %s186, 8
      %s188 = scalar_lea.vmem %s3, %s187
      %p189 = scmp.lt.s32.totalorder %s18, 1
      %s190 = scalar_select %p189, %s18, 1
      %p191 = scmp.lt.s32.totalorder %s19, 0
      %s192 = scalar_select %p191, %s19, 0
      %s193 = smul.addr %s192, 3
      %s194 = smul.addr %s190, 3
      %s195 = sadd.s32 %s193, %s194
      %s196 = smul.addr %s195, 8
      %s197 = scalar_lea.vmem %s0, %s196
      %s198 = smul.u32 2, %s19
      %p199 = scmp.lt.s32.totalorder %s18, 1
      %s200 = scalar_select %p199, %s18, 1
      %p201 = scmp.lt.s32.totalorder %s198, 1
      %s202 = scalar_select %p201, %s198, 1
      %s203 = smul.addr %s200, 8
      %s204 = sadd.s32 %s202, %s203
      %s205 = smul.addr %s204, 8
      %s206 = scalar_lea.vmem %s3, %s205
      %s207 = smul.u32 2, %s19
      %v208 = vld [vmem:[%s1] sm:$0xff]
      %v209 = vld [vmem:[%s1 + $0x8] sm:$0xff]
      %v210 = vld [vmem:[%s1 + $0x10] sm:$0xff]
      %v211 = vld [vmem:[%s1 + $0x18] sm:$0xff]
      %s212 = scalar_lea.vmem %s1, 32
      %v213 = vld [vmem:[%s212] sm:$0xff]
      %v214 = vld [vmem:[%s212 + $0x8] sm:$0xff]
      %v215 = vld [vmem:[%s212 + $0x10] sm:$0xff]
      %v216 = vld [vmem:[%s212 + $0x18] sm:$0xff]
      %s217 = scalar_lea.vmem %s1, 64
      %v218 = vld [vmem:[%s217] sm:$0xff]
      %v219 = vld [vmem:[%s217 + $0x8] sm:$0xff]
      %v220 = vld [vmem:[%s217 + $0x10] sm:$0xff]
      %v221 = vld [vmem:[%s217 + $0x18] sm:$0xff]
      %s222 = scalar_lea.vmem %s1, 96
      %v223 = vld [vmem:[%s222] sm:$0xff]
      %v224 = vld [vmem:[%s222 + $0x8] sm:$0xff]
      %v225 = vld [vmem:[%s222 + $0x10] sm:$0xff]
      %v226 = vld [vmem:[%s222 + $0x18] sm:$0xff]
      %s227 = scalar_lea.vmem %s1, 128
      %v228 = vld [vmem:[%s227] sm:$0xff]
      %v229 = vld [vmem:[%s227 + $0x8] sm:$0xff]
      %v230 = vld [vmem:[%s227 + $0x10] sm:$0xff]
      %v231 = vld [vmem:[%s227 + $0x18] sm:$0xff]
      %v232 = vld [vmem:[%s2] sm:$0xff]
      %v233 = vld [vmem:[%s2 + $0x8] sm:$0xff]
      %v234 = vld [vmem:[%s2 + $0x10] sm:$0xff]
      %v235 = vld [vmem:[%s2 + $0x18] sm:$0xff]
      %v236 = vld [vmem:[%s197] sm:$0x1f]
      %v237 = vld [vmem:[%s197 + $0x8] sm:$0x1f]
      %v238 = vld [vmem:[%s197 + $0x10] sm:$0x1f]
      %242 = vrot.lane.b32.xlu0 %v236, 112
      %v243 = vpop.permute.xlu0 %242
      %244 = vrot.lane.b32.xlu0 %v237, 112
      %v245 = vpop.permute.xlu0 %244
      %246 = vrot.lane.b32.xlu0 %v238, 112
      %v247 = vpop.permute.xlu0 %246
      %vm248 = vcmask 916480
      %v249 = vsel %vm248, %v243, %v245
      %v250 = vsel %vm248, %v245, %v247
      %vm251 = vcmask 39936
      %v253 = vsel %vm251, %v213, 0
      %v256 = vsel %vm251, %v214, 0
      %v259 = vsel %vm251, %v215, 0
      %v262 = vsel %vm251, %v216, 0
      %vm264 = vcmask 1044480
      %v265 = vsel %vm264, %v249, 0
      %v267 = vsel %vm264, %v250, 0
      %269 = vmatprep.subr.mxu0 %v267
      %270 = vmatpush1.msra.mxu0 %v265
      %271 = vmatprep.subr.mxu0 0.0
      %272 = vmatpush1.msra.mxu0 0.0
      %273 = vmatprep.subr.mxu0 0.0
      %274 = vmatpush1.msra.mxu0 0.0
      %275 = vmatprep.subr.mxu0 0.0
      %276 = vmatpush1.msra.mxu0 0.0
      %277 = vmatprep.subr.mxu0 0.0
      %278 = vmatpush1.msra.mxu0 0.0
      %279 = vmatprep.subr.mxu0 0.0
      %280 = vmatpush1.msra.mxu0 0.0
      %281 = vmatprep.subr.mxu0 0.0
      %282 = vmatpush1.msra.mxu0 0.0
      %283 = vmatprep.subr.mxu0 0.0
      %284 = vmatpush1.msra.mxu0 0.0
      %285 = vmatprep.subr.mxu0 0.0
      %286 = vmatpush1.msra.mxu0 0.0
      %287 = vmatprep.subr.mxu0 0.0
      %288 = vmatpush1.msra.mxu0 0.0
      %289 = vmatprep.subr.mxu0 0.0
      %290 = vmatpush1.msra.mxu0 0.0
      %291 = vmatprep.subr.mxu0 0.0
      %292 = vmatpush1.msra.mxu0 0.0
      %293 = vmatprep.subr.mxu0 0.0
      %294 = vmatpush1.msra.mxu0 0.0
      %295 = vmatprep.subr.mxu0 0.0
      %296 = vmatpush1.msra.mxu0 0.0
      %297 = vmatprep.subr.mxu0 0.0
      %298 = vmatpush1.msra.mxu0 0.0
      %299 = vmatprep.subr.mxu0 0.0
      %300 = vmatpush1.msra.mxu0 0.0
      %301 = vmatprep.subr.mxu0 0.0
      %302 = vmatpush1.msra.mxu0 0.0
      %303 = vmatprep.subr.mxu0 0.0
      %304 = vmatpush1.msra.mxu0 0.0
      %305 = vmatprep.subr.mxu0 0.0
      %306 = vmatpush1.msra.mxu0 0.0
      %307 = vmatprep.subr.mxu0 0.0
      %308 = vmatpush1.msra.mxu0 0.0
      %309 = vmatprep.subr.mxu0 0.0
      %310 = vmatpush1.msra.mxu0 0.0
      %311 = vmatprep.subr.mxu0 0.0
      %312 = vmatpush1.msra.mxu0 0.0
      %313 = vmatprep.subr.mxu0 0.0
      %314 = vmatpush1.msra.mxu0 0.0
      %315 = vmatprep.subr.mxu0 0.0
      %316 = vmatpush1.msra.mxu0 0.0
      %317 = vmatprep.subr.mxu0 0.0
      %318 = vmatpush1.msra.mxu0 0.0
      %319 = vmatprep.subr.mxu0 0.0
      %320 = vmatpush1.msra.mxu0 0.0
      %321 = vmatprep.subr.mxu0 0.0
      %322 = vmatpush1.msra.mxu0 0.0
      %323 = vmatprep.subr.mxu0 0.0
      %324 = vmatpush1.msra.mxu0 0.0
      %325 = vmatprep.subr.mxu0 0.0
      %326 = vmatpush1.msra.mxu0 0.0
      %327 = vmatprep.subr.mxu0 0.0
      %328 = vmatpush1.msra.mxu0 0.0
      %329 = vmatprep.subr.mxu0 0.0
      %330 = vmatpush1.msra.mxu0 0.0
      %331 = vmatprep.subr.mxu0 0.0
      %332 = vmatpush1.msra.mxu0 0.0
      %333 = vmatprep.mubr.f32.mxu0 0.0
      %334 = vmatmul.mubr.f32.gmra.mrb[0].mxu0 %v253
      %v335 = vpop.f32.mrb[0].mxu0
      %v336 = vadd.f32 0.0, %v335
      %v337 = vpop.f32.mrb[0].mxu0
      %v338 = vadd.f32 0.0, %v337
      %339 = vmatprep.mubr.f32.mxu0 0.0
      %340 = vmatmul.mubr.f32.gmra.mrb[0].mxu0 %v256
      %v341 = vpop.f32.mrb[0].mxu0
      %v342 = vadd.f32 0.0, %v341
      %v343 = vpop.f32.mrb[0].mxu0
      %v344 = vadd.f32 0.0, %v343
      %345 = vmatprep.mubr.f32.mxu0 0.0
      %346 = vmatmul.mubr.f32.gmra.mrb[0].mxu0 %v259
      %v347 = vpop.f32.mrb[0].mxu0
      %v348 = vadd.f32 0.0, %v347
      %v349 = vpop.f32.mrb[0].mxu0
      %v350 = vadd.f32 0.0, %v349
      %351 = vmatprep.mubr.f32.mxu0 0.0
      %352 = vmatmul.mubr.f32.gmra.mrb[0].mxu0 %v262
      %v353 = vpop.f32.mrb[0].mxu0
      %v354 = vadd.f32 0.0, %v353
      %v355 = vpop.f32.mrb[0].mxu0
      %v356 = vadd.f32 0.0, %v355
      %357 = vdwg.mxu0
      %v359 = vsel %vm251, %v208, 0
      %v362 = vsel %vm251, %v209, 0
      %v365 = vsel %vm251, %v210, 0
      %v368 = vsel %vm251, %v211, 0
      %v370 = vsel %vm264, %v236, 0
      %v372 = vsel %vm264, %v237, 0
      %374 = vmatprep.subr.mxu0 %v372
      %375 = vmatpush1.msra.mxu0 %v370
      %376 = vmatprep.subr.mxu0 0.0
      %377 = vmatpush1.msra.mxu0 0.0
      %378 = vmatprep.subr.mxu0 0.0
      %379 = vmatpush1.msra.mxu0 0.0
      %380 = vmatprep.subr.mxu0 0.0
      %381 = vmatpush1.msra.mxu0 0.0
      %382 = vmatprep.subr.mxu0 0.0
      %383 = vmatpush1.msra.mxu0 0.0
      %384 = vmatprep.subr.mxu0 0.0
      %385 = vmatpush1.msra.mxu0 0.0
      %386 = vmatprep.subr.mxu0 0.0
      %387 = vmatpush1.msra.mxu0 0.0
      %388 = vmatprep.subr.mxu0 0.0
      %389 = vmatpush1.msra.mxu0 0.0
      %390 = vmatprep.subr.mxu0 0.0
      %391 = vmatpush1.msra.mxu0 0.0
      %392 = vmatprep.subr.mxu0 0.0
      %393 = vmatpush1.msra.mxu0 0.0
      %394 = vmatprep.subr.mxu0 0.0
      %395 = vmatpush1.msra.mxu0 0.0
      %396 = vmatprep.subr.mxu0 0.0
      %397 = vmatpush1.msra.mxu0 0.0
      %398 = vmatprep.subr.mxu0 0.0
      %399 = vmatpush1.msra.mxu0 0.0
      %400 = vmatprep.subr.mxu0 0.0
      %401 = vmatpush1.msra.mxu0 0.0
      %402 = vmatprep.subr.mxu0 0.0
      %403 = vmatpush1.msra.mxu0 0.0
      %404 = vmatprep.subr.mxu0 0.0
      %405 = vmatpush1.msra.mxu0 0.0
      %406 = vmatprep.subr.mxu0 0.0
      %407 = vmatpush1.msra.mxu0 0.0
      %408 = vmatprep.subr.mxu0 0.0
      %409 = vmatpush1.msra.mxu0 0.0
      %410 = vmatprep.subr.mxu0 0.0
      %411 = vmatpush1.msra.mxu0 0.0
      %412 = vmatprep.subr.mxu0 0.0
      %413 = vmatpush1.msra.mxu0 0.0
      %414 = vmatprep.subr.mxu0 0.0
      %415 = vmatpush1.msra.mxu0 0.0
      %416 = vmatprep.subr.mxu0 0.0
      %417 = vmatpush1.msra.mxu0 0.0
      %418 = vmatprep.subr.mxu0 0.0
      %419 = vmatpush1.msra.mxu0 0.0
      %420 = vmatprep.subr.mxu0 0.0
      %421 = vmatpush1.msra.mxu0 0.0
      %422 = vmatprep.subr.mxu0 0.0
      %423 = vmatpush1.msra.mxu0 0.0
      %424 = vmatprep.subr.mxu0 0.0
      %425 = vmatpush1.msra.mxu0 0.0
      %426 = vmatprep.subr.mxu0 0.0
      %427 = vmatpush1.msra.mxu0 0.0
      %428 = vmatprep.subr.mxu0 0.0
      %429 = vmatpush1.msra.mxu0 0.0
      %430 = vmatprep.subr.mxu0 0.0
      %431 = vmatpush1.msra.mxu0 0.0
      %432 = vmatprep.subr.mxu0 0.0
      %433 = vmatpush1.msra.mxu0 0.0
      %434 = vmatprep.subr.mxu0 0.0
      %435 = vmatpush1.msra.mxu0 0.0
      %436 = vmatprep.subr.mxu0 0.0
      %437 = vmatpush1.msra.mxu0 0.0
      %438 = vmatprep.mubr.f32.mxu0 0.0
      %439 = vmatmul.mubr.f32.gmra.mrb[0].mxu0 %v359
      %v440 = vpop.f32.mrb[0].mxu0
      %v441 = vadd.f32 %v336, %v440
      %v442 = vpop.f32.mrb[0].mxu0
      %v443 = vadd.f32 %v338, %v442
      %444 = vmatprep.mubr.f32.mxu0 0.0
      %445 = vmatmul.mubr.f32.gmra.mrb[0].mxu0 %v362
      %v446 = vpop.f32.mrb[0].mxu0
      %v447 = vadd.f32 %v342, %v446
      %v448 = vpop.f32.mrb[0].mxu0
      %v449 = vadd.f32 %v344, %v448
      %450 = vmatprep.mubr.f32.mxu0 0.0
      %451 = vmatmul.mubr.f32.gmra.mrb[0].mxu0 %v365
      %v452 = vpop.f32.mrb[0].mxu0
      %v453 = vadd.f32 %v348, %v452
      %v454 = vpop.f32.mrb[0].mxu0
      %v455 = vadd.f32 %v350, %v454
      %456 = vmatprep.mubr.f32.mxu0 0.0
      %457 = vmatmul.mubr.f32.gmra.mrb[0].mxu0 %v368
      %v458 = vpop.f32.mrb[0].mxu0
      %v459 = vadd.f32 %v354, %v458
      %v460 = vpop.f32.mrb[0].mxu0
      %v461 = vadd.f32 %v356, %v460
      %462 = vdwg.mxu0
      %463 = vrot.lane.b32.xlu0 %v236, 96
      %v464 = vpop.permute.xlu0 %463
      %465 = vrot.lane.b32.xlu0 %v237, 96
      %v466 = vpop.permute.xlu0 %465
      %467 = vrot.lane.b32.xlu0 %v238, 96
      %v468 = vpop.permute.xlu0 %467
      %vm469 = vcmask 785408
      %v470 = vsel %vm469, %v464, %v466
      %v471 = vsel %vm469, %v466, %v468
      %v473 = vsel %vm251, %v218, 0
      %v476 = vsel %vm251, %v219, 0
      %v479 = vsel %vm251, %v220, 0
      %v482 = vsel %vm251, %v221, 0
      %v484 = vsel %vm264, %v470, 0
      %v486 = vsel %vm264, %v471, 0
      %488 = vmatprep.subr.mxu0 %v486
      %489 = vmatpush1.msra.mxu0 %v484
      %490 = vmatprep.subr.mxu0 0.0
      %491 = vmatpush1.msra.mxu0 0.0
      %492 = vmatprep.subr.mxu0 0.0
      %493 = vmatpush1.msra.mxu0 0.0
      %494 = vmatprep.subr.mxu0 0.0
      %495 = vmatpush1.msra.mxu0 0.0
      %496 = vmatprep.subr.mxu0 0.0
      %497 = vmatpush1.msra.mxu0 0.0
      %498 = vmatprep.subr.mxu0 0.0
      %499 = vmatpush1.msra.mxu0 0.0
      %500 = vmatprep.subr.mxu0 0.0
      %501 = vmatpush1.msra.mxu0 0.0
      %502 = vmatprep.subr.mxu0 0.0
      %503 = vmatpush1.msra.mxu0 0.0
      %504 = vmatprep.subr.mxu0 0.0
      %505 = vmatpush1.msra.mxu0 0.0
      %506 = vmatprep.subr.mxu0 0.0
      %507 = vmatpush1.msra.mxu0 0.0
      %508 = vmatprep.subr.mxu0 0.0
      %509 = vmatpush1.msra.mxu0 0.0
      %510 = vmatprep.subr.mxu0 0.0
      %511 = vmatpush1.msra.mxu0 0.0
      %512 = vmatprep.subr.mxu0 0.0
      %513 = vmatpush1.msra.mxu0 0.0
      %514 = vmatprep.subr.mxu0 0.0
      %515 = vmatpush1.msra.mxu0 0.0
      %516 = vmatprep.subr.mxu0 0.0
      %517 = vmatpush1.msra.mxu0 0.0
      %518 = vmatprep.subr.mxu0 0.0
      %519 = vmatpush1.msra.mxu0 0.0
      %520 = vmatprep.subr.mxu0 0.0
      %521 = vmatpush1.msra.mxu0 0.0
      %522 = vmatprep.subr.mxu0 0.0
      %523 = vmatpush1.msra.mxu0 0.0
      %524 = vmatprep.subr.mxu0 0.0
      %525 = vmatpush1.msra.mxu0 0.0
      %526 = vmatprep.subr.mxu0 0.0
      %527 = vmatpush1.msra.mxu0 0.0
      %528 = vmatprep.subr.mxu0 0.0
      %529 = vmatpush1.msra.mxu0 0.0
      %530 = vmatprep.subr.mxu0 0.0
      %531 = vmatpush1.msra.mxu0 0.0
      %532 = vmatprep.subr.mxu0 0.0
      %533 = vmatpush1.msra.mxu0 0.0
      %534 = vmatprep.subr.mxu0 0.0
      %535 = vmatpush1.msra.mxu0 0.0
      %536 = vmatprep.subr.mxu0 0.0
      %537 = vmatpush1.msra.mxu0 0.0
      %538 = vmatprep.subr.mxu0 0.0
      %539 = vmatpush1.msra.mxu0 0.0
      %540 = vmatprep.subr.mxu0 0.0
      %541 = vmatpush1.msra.mxu0 0.0
      %542 = vmatprep.subr.mxu0 0.0
      %543 = vmatpush1.msra.mxu0 0.0
      %544 = vmatprep.subr.mxu0 0.0
      %545 = vmatpush1.msra.mxu0 0.0
      %546 = vmatprep.subr.mxu0 0.0
      %547 = vmatpush1.msra.mxu0 0.0
      %548 = vmatprep.subr.mxu0 0.0
      %549 = vmatpush1.msra.mxu0 0.0
      %550 = vmatprep.subr.mxu0 0.0
      %551 = vmatpush1.msra.mxu0 0.0
      %552 = vmatprep.mubr.f32.mxu0 0.0
      %553 = vmatmul.mubr.f32.gmra.mrb[0].mxu0 %v473
      %v554 = vpop.f32.mrb[0].mxu0
      %v555 = vadd.f32 0.0, %v554
      %v556 = vpop.f32.mrb[0].mxu0
      %v557 = vadd.f32 0.0, %v556
      %558 = vmatprep.mubr.f32.mxu0 0.0
      %559 = vmatmul.mubr.f32.gmra.mrb[0].mxu0 %v476
      %v560 = vpop.f32.mrb[0].mxu0
      %v561 = vadd.f32 0.0, %v560
      %v562 = vpop.f32.mrb[0].mxu0
      %v563 = vadd.f32 0.0, %v562
      %564 = vmatprep.mubr.f32.mxu0 0.0
      %565 = vmatmul.mubr.f32.gmra.mrb[0].mxu0 %v479
      %v566 = vpop.f32.mrb[0].mxu0
      %v567 = vadd.f32 0.0, %v566
      %v568 = vpop.f32.mrb[0].mxu0
      %v569 = vadd.f32 0.0, %v568
      %570 = vmatprep.mubr.f32.mxu0 0.0
      %571 = vmatmul.mubr.f32.gmra.mrb[0].mxu0 %v482
      %v572 = vpop.f32.mrb[0].mxu0
      %v573 = vadd.f32 0.0, %v572
      %v574 = vpop.f32.mrb[0].mxu0
      %v575 = vadd.f32 0.0, %v574
      %576 = vdwg.mxu0
      %v577 = vadd.f32 %v441, %v555
      %v578 = vadd.f32 %v443, %v557
      %v579 = vadd.f32 %v447, %v561
      %v580 = vadd.f32 %v449, %v563
      %v581 = vadd.f32 %v453, %v567
      %v582 = vadd.f32 %v455, %v569
      %v583 = vadd.f32 %v459, %v573
      %v584 = vadd.f32 %v461, %v575
      %585 = vrot.lane.b32.xlu0 %v236, 80
      %v586 = vpop.permute.xlu0 %585
      %587 = vrot.lane.b32.xlu0 %v237, 80
      %v588 = vpop.permute.xlu0 %587
      %589 = vrot.lane.b32.xlu0 %v238, 80
      %v590 = vpop.permute.xlu0 %589
      %vm591 = vcmask 654336
      %v592 = vsel %vm591, %v586, %v588
      %v593 = vsel %vm591, %v588, %v590
      %v595 = vsel %vm251, %v223, 0
      %v598 = vsel %vm251, %v224, 0
      %v601 = vsel %vm251, %v225, 0
      %v604 = vsel %vm251, %v226, 0
      %v606 = vsel %vm264, %v592, 0
      %v608 = vsel %vm264, %v593, 0
      %610 = vmatprep.subr.mxu0 %v608
      %611 = vmatpush1.msra.mxu0 %v606
      %612 = vmatprep.subr.mxu0 0.0
      %613 = vmatpush1.msra.mxu0 0.0
      %614 = vmatprep.subr.mxu0 0.0
      %615 = vmatpush1.msra.mxu0 0.0
      %616 = vmatprep.subr.mxu0 0.0
      %617 = vmatpush1.msra.mxu0 0.0
      %618 = vmatprep.subr.mxu0 0.0
      %619 = vmatpush1.msra.mxu0 0.0
      %620 = vmatprep.subr.mxu0 0.0
      %621 = vmatpush1.msra.mxu0 0.0
      %622 = vmatprep.subr.mxu0 0.0
      %623 = vmatpush1.msra.mxu0 0.0
      %624 = vmatprep.subr.mxu0 0.0
      %625 = vmatpush1.msra.mxu0 0.0
      %626 = vmatprep.subr.mxu0 0.0
      %627 = vmatpush1.msra.mxu0 0.0
      %628 = vmatprep.subr.mxu0 0.0
      %629 = vmatpush1.msra.mxu0 0.0
      %630 = vmatprep.subr.mxu0 0.0
      %631 = vmatpush1.msra.mxu0 0.0
      %632 = vmatprep.subr.mxu0 0.0
      %633 = vmatpush1.msra.mxu0 0.0
      %634 = vmatprep.subr.mxu0 0.0
      %635 = vmatpush1.msra.mxu0 0.0
      %636 = vmatprep.subr.mxu0 0.0
      %637 = vmatpush1.msra.mxu0 0.0
      %638 = vmatprep.subr.mxu0 0.0
      %639 = vmatpush1.msra.mxu0 0.0
      %640 = vmatprep.subr.mxu0 0.0
      %641 = vmatpush1.msra.mxu0 0.0
      %642 = vmatprep.subr.mxu0 0.0
      %643 = vmatpush1.msra.mxu0 0.0
      %644 = vmatprep.subr.mxu0 0.0
      %645 = vmatpush1.msra.mxu0 0.0
      %646 = vmatprep.subr.mxu0 0.0
      %647 = vmatpush1.msra.mxu0 0.0
      %648 = vmatprep.subr.mxu0 0.0
      %649 = vmatpush1.msra.mxu0 0.0
      %650 = vmatprep.subr.mxu0 0.0
      %651 = vmatpush1.msra.mxu0 0.0
      %652 = vmatprep.subr.mxu0 0.0
      %653 = vmatpush1.msra.mxu0 0.0
      %654 = vmatprep.subr.mxu0 0.0
      %655 = vmatpush1.msra.mxu0 0.0
      %656 = vmatprep.subr.mxu0 0.0
      %657 = vmatpush1.msra.mxu0 0.0
      %658 = vmatprep.subr.mxu0 0.0
      %659 = vmatpush1.msra.mxu0 0.0
      %660 = vmatprep.subr.mxu0 0.0
      %661 = vmatpush1.msra.mxu0 0.0
      %662 = vmatprep.subr.mxu0 0.0
      %663 = vmatpush1.msra.mxu0 0.0
      %664 = vmatprep.subr.mxu0 0.0
      %665 = vmatpush1.msra.mxu0 0.0
      %666 = vmatprep.subr.mxu0 0.0
      %667 = vmatpush1.msra.mxu0 0.0
      %668 = vmatprep.subr.mxu0 0.0
      %669 = vmatpush1.msra.mxu0 0.0
      %670 = vmatprep.subr.mxu0 0.0
      %671 = vmatpush1.msra.mxu0 0.0
      %672 = vmatprep.subr.mxu0 0.0
      %673 = vmatpush1.msra.mxu0 0.0
      %674 = vmatprep.mubr.f32.mxu0 0.0
      %675 = vmatmul.mubr.f32.gmra.mrb[0].mxu0 %v595
      %v676 = vpop.f32.mrb[0].mxu0
      %v677 = vadd.f32 0.0, %v676
      %v678 = vpop.f32.mrb[0].mxu0
      %v679 = vadd.f32 0.0, %v678
      %680 = vmatprep.mubr.f32.mxu0 0.0
      %681 = vmatmul.mubr.f32.gmra.mrb[0].mxu0 %v598
      %v682 = vpop.f32.mrb[0].mxu0
      %v683 = vadd.f32 0.0, %v682
      %v684 = vpop.f32.mrb[0].mxu0
      %v685 = vadd.f32 0.0, %v684
      %686 = vmatprep.mubr.f32.mxu0 0.0
      %687 = vmatmul.mubr.f32.gmra.mrb[0].mxu0 %v601
      %v688 = vpop.f32.mrb[0].mxu0
      %v689 = vadd.f32 0.0, %v688
      %v690 = vpop.f32.mrb[0].mxu0
      %v691 = vadd.f32 0.0, %v690
      %692 = vmatprep.mubr.f32.mxu0 0.0
      %693 = vmatmul.mubr.f32.gmra.mrb[0].mxu0 %v604
      %v694 = vpop.f32.mrb[0].mxu0
      %v695 = vadd.f32 0.0, %v694
      %v696 = vpop.f32.mrb[0].mxu0
      %v697 = vadd.f32 0.0, %v696
      %698 = vdwg.mxu0
      %v699 = vadd.f32 %v577, %v677
      %v700 = vadd.f32 %v578, %v679
      %v701 = vadd.f32 %v579, %v683
      %v702 = vadd.f32 %v580, %v685
      %v703 = vadd.f32 %v581, %v689
      %v704 = vadd.f32 %v582, %v691
      %v705 = vadd.f32 %v583, %v695
      %v706 = vadd.f32 %v584, %v697
      %707 = vrot.lane.b32.xlu0 %v236, 64
      %v708 = vpop.permute.xlu0 %707
      %709 = vrot.lane.b32.xlu0 %v237, 64
      %v710 = vpop.permute.xlu0 %709
      %711 = vrot.lane.b32.xlu0 %v238, 64
      %v712 = vpop.permute.xlu0 %711
      %vm713 = vcmask 523264
      %v714 = vsel %vm713, %v708, %v710
      %v715 = vsel %vm713, %v710, %v712
      %v717 = vsel %vm251, %v228, 0
      %v720 = vsel %vm251, %v229, 0
      %v723 = vsel %vm251, %v230, 0
      %v726 = vsel %vm251, %v231, 0
      %v728 = vsel %vm264, %v714, 0
      %v730 = vsel %vm264, %v715, 0
      %732 = vmatprep.subr.mxu0 %v730
      %733 = vmatpush1.msra.mxu0 %v728
      %734 = vmatprep.subr.mxu0 0.0
      %735 = vmatpush1.msra.mxu0 0.0
      %736 = vmatprep.subr.mxu0 0.0
      %737 = vmatpush1.msra.mxu0 0.0
      %738 = vmatprep.subr.mxu0 0.0
      %739 = vmatpush1.msra.mxu0 0.0
      %740 = vmatprep.subr.mxu0 0.0
      %741 = vmatpush1.msra.mxu0 0.0
      %742 = vmatprep.subr.mxu0 0.0
      %743 = vmatpush1.msra.mxu0 0.0
      %744 = vmatprep.subr.mxu0 0.0
      %745 = vmatpush1.msra.mxu0 0.0
      %746 = vmatprep.subr.mxu0 0.0
      %747 = vmatpush1.msra.mxu0 0.0
      %748 = vmatprep.subr.mxu0 0.0
      %749 = vmatpush1.msra.mxu0 0.0
      %750 = vmatprep.subr.mxu0 0.0
      %751 = vmatpush1.msra.mxu0 0.0
      %752 = vmatprep.subr.mxu0 0.0
      %753 = vmatpush1.msra.mxu0 0.0
      %754 = vmatprep.subr.mxu0 0.0
      %755 = vmatpush1.msra.mxu0 0.0
      %756 = vmatprep.subr.mxu0 0.0
      %757 = vmatpush1.msra.mxu0 0.0
      %758 = vmatprep.subr.mxu0 0.0
      %759 = vmatpush1.msra.mxu0 0.0
      %760 = vmatprep.subr.mxu0 0.0
      %761 = vmatpush1.msra.mxu0 0.0
      %762 = vmatprep.subr.mxu0 0.0
      %763 = vmatpush1.msra.mxu0 0.0
      %764 = vmatprep.subr.mxu0 0.0
      %765 = vmatpush1.msra.mxu0 0.0
      %766 = vmatprep.subr.mxu0 0.0
      %767 = vmatpush1.msra.mxu0 0.0
      %768 = vmatprep.subr.mxu0 0.0
      %769 = vmatpush1.msra.mxu0 0.0
      %770 = vmatprep.subr.mxu0 0.0
      %771 = vmatpush1.msra.mxu0 0.0
      %772 = vmatprep.subr.mxu0 0.0
      %773 = vmatpush1.msra.mxu0 0.0
      %774 = vmatprep.subr.mxu0 0.0
      %775 = vmatpush1.msra.mxu0 0.0
      %776 = vmatprep.subr.mxu0 0.0
      %777 = vmatpush1.msra.mxu0 0.0
      %778 = vmatprep.subr.mxu0 0.0
      %779 = vmatpush1.msra.mxu0 0.0
      %780 = vmatprep.subr.mxu0 0.0
      %781 = vmatpush1.msra.mxu0 0.0
      %782 = vmatprep.subr.mxu0 0.0
      %783 = vmatpush1.msra.mxu0 0.0
      %784 = vmatprep.subr.mxu0 0.0
      %785 = vmatpush1.msra.mxu0 0.0
      %786 = vmatprep.subr.mxu0 0.0
      %787 = vmatpush1.msra.mxu0 0.0
      %788 = vmatprep.subr.mxu0 0.0
      %789 = vmatpush1.msra.mxu0 0.0
      %790 = vmatprep.subr.mxu0 0.0
      %791 = vmatpush1.msra.mxu0 0.0
      %792 = vmatprep.subr.mxu0 0.0
      %793 = vmatpush1.msra.mxu0 0.0
      %794 = vmatprep.subr.mxu0 0.0
      %795 = vmatpush1.msra.mxu0 0.0
      %796 = vmatprep.mubr.f32.mxu0 0.0
      %797 = vmatmul.mubr.f32.gmra.mrb[0].mxu0 %v717
      %v798 = vpop.f32.mrb[0].mxu0
      %v799 = vadd.f32 0.0, %v798
      %v800 = vpop.f32.mrb[0].mxu0
      %v801 = vadd.f32 0.0, %v800
      %802 = vmatprep.mubr.f32.mxu0 0.0
      %803 = vmatmul.mubr.f32.gmra.mrb[0].mxu0 %v720
      %v804 = vpop.f32.mrb[0].mxu0
      %v805 = vadd.f32 0.0, %v804
      %v806 = vpop.f32.mrb[0].mxu0
      %v807 = vadd.f32 0.0, %v806
      %808 = vmatprep.mubr.f32.mxu0 0.0
      %809 = vmatmul.mubr.f32.gmra.mrb[0].mxu0 %v723
      %v810 = vpop.f32.mrb[0].mxu0
      %v811 = vadd.f32 0.0, %v810
      %v812 = vpop.f32.mrb[0].mxu0
      %v813 = vadd.f32 0.0, %v812
      %814 = vmatprep.mubr.f32.mxu0 0.0
      %815 = vmatmul.mubr.f32.gmra.mrb[0].mxu0 %v726
      %v816 = vpop.f32.mrb[0].mxu0
      %v817 = vadd.f32 0.0, %v816
      %v818 = vpop.f32.mrb[0].mxu0
      %v819 = vadd.f32 0.0, %v818
      %820 = vdwg.mxu0
      %v821 = vadd.f32 %v699, %v799
      %v822 = vadd.f32 %v700, %v801
      %v823 = vadd.f32 %v701, %v805
      %v824 = vadd.f32 %v702, %v807
      %v825 = vadd.f32 %v703, %v811
      %v826 = vadd.f32 %v704, %v813
      %v827 = vadd.f32 %v705, %v817
      %v828 = vadd.f32 %v706, %v819
      %830 = vset.pattern.permute.xlu0 0
      %831 = vperm.xlu0 %830, %v232
      %v832 = vpop.permute.xlu0 %831
      %835 = vset.pattern.permute.xlu0 0
      %836 = vperm.xlu0 %835, %v233
      %v837 = vpop.permute.xlu0 %836
      %840 = vset.pattern.permute.xlu0 0
      %841 = vperm.xlu0 %840, %v234
      %v842 = vpop.permute.xlu0 %841
      %845 = vset.pattern.permute.xlu0 0
      %846 = vperm.xlu0 %845, %v235
      %v847 = vpop.permute.xlu0 %846
      %v849 = vadd.f32 %v821, %v832
      %v850 = vadd.f32 %v822, %v832
      %v851 = vadd.f32 %v823, %v837
      %v852 = vadd.f32 %v824, %v837
      %v853 = vadd.f32 %v825, %v842
      %v854 = vadd.f32 %v826, %v842
      %v855 = vadd.f32 %v827, %v847
      %v856 = vadd.f32 %v828, %v847
      %857 = vst [vmem:[%s206] sm:$0xff] %v849
      %858 = vst [vmem:[%s206 + $0x8] sm:$0xff] %v850
      %859 = vst [vmem:[%s206 + $0x10] sm:$0xff] %v851
      %860 = vst [vmem:[%s206 + $0x18] sm:$0xff] %v852
      %861 = vst [vmem:[%s206 + $0x20] sm:$0xff] %v853
      %862 = vst [vmem:[%s206 + $0x28] sm:$0xff] %v854
      %863 = vst [vmem:[%s206 + $0x30] sm:$0xff] %v855
      %864 = vst [vmem:[%s206 + $0x38] sm:$0xff] %v856
      %s865 = smul.u32 2, %s19
      %p866 = scmp.lt.s32.totalorder %s18, 1
      %s867 = scalar_select %p866, %s18, 1
      %p868 = scmp.lt.s32.totalorder %s865, 1
      %s869 = scalar_select %p868, %s865, 1
      %s870 = smul.addr %s867, 8
      %s871 = sadd.s32 %s869, %s870
      %s872 = smul.addr %s871, 8
      %s873 = scalar_lea.vmem %s3, %s872
      // Predicated region
      $region33: #{_forward_impl.1} parent=31 // pred_check
        %p874 = pneg %p116
      $region34: #{_forward_impl.1} parent=31 // pred_check_branch
        %876 = sbr.rel (%p874) target = $region36
      $region35: #{_forward_impl.1} parent=31 // pred_region
        %s877 = smul.u32 2, %s19
      $region36: #{_forward_impl.1} parent=31 // pred_fallthru
        _
    $region32: #{_forward_impl.1} parent=5 // pred_fallthru
      _
    %p878 = scmp.le.s32.totalorder 2, %s9
    // Predicated region
    $region37: #{_forward_impl.1} parent=5 // pred_check
      %p879 = pneg %p878
    $region38: #{_forward_impl.1} parent=5 // pred_check_branch
      %881 = sbr.rel (%p879) target = $region40
    $region39: #{_forward_impl.1} parent=5 // pred_region
      %s882 = ssub.s32 %s9, 2
      // Predicated region
      $region41: #{_forward_impl.1} parent=39 // pred_check
        %p883 = pneg %p122
      $region42: #{_forward_impl.1} parent=39 // pred_check_branch
        %885 = sbr.rel (%p883) target = $region44
      $region43: #{_forward_impl.1} parent=39 // pred_region
        %s886 = smul.u32 2, %s21
        %p887 = scmp.lt.s32.totalorder %s20, 1
        %s888 = scalar_select %p887, %s20, 1
        %p889 = scmp.lt.s32.totalorder %s886, 1
        %s890 = scalar_select %p889, %s886, 1
        %s891 = smul.addr %s888, 8
        %s892 = sadd.s32 %s890, %s891
        %s893 = smul.addr %s892, 8
        %s894 = scalar_lea.vmem %s3, %s893
      $region44: #{_forward_impl.1} parent=39 // pred_fallthru
        _
    $region40: #{_forward_impl.1} parent=5 // pred_fallthru
      _
  $region6: #{_forward_impl.1} parent=0 // loop_footer
    %s13 = sadd.s32 1, %s9
  $region7: #{_forward_impl.1} parent=0 // loop_footer_branch
    %8 = sbr.rel target = $region3
  $region8: #{_forward_impl.1} parent=0 // loop_exit
    _

</llo_original>
